<compile_context>
chip_gen: v5e
topology: v5e:2x2
jax: 0.10.0
libtpu: 0.0.40
codegen_flags: <defaults>
</compile_context>

<pallas_src>
import jax
import jax.numpy as jnp
from jax.experimental import pallas as pl
from jax.experimental.pallas import tpu as pltpu

_LANES = 512            # lane-dense row width (multiple of 128)
_MAX_TILE_ROWS = 4096   # upper cap on rows per tile (8 MiB f32 @ 512 lanes)

_vmem_limit_cache = None


def _vmem_limit() -> int:
    """Scoped-VMEM limit: ~75% of physical VMEM, clamped to [32, 96] MiB."""
    global _vmem_limit_cache
    if _vmem_limit_cache is None:
        try:
            cap = int(getattr(pltpu.get_tpu_info(), "vmem_capacity_bytes",
                              64 << 20))
        except Exception:
            cap = 64 << 20          # conservative: v7x per-TensorCore VMEM
        _vmem_limit_cache = max(min((cap * 3) // 4, 96 << 20), 32 << 20)
    return _vmem_limit_cache


def _sublane_multiple(itemsize: int) -> int:
    # f32 -> 8, bf16/f16 -> 16, int8/fp8 -> 32 (packed sublane layout).
    return {4: 8, 2: 16, 1: 32}.get(itemsize, 8)


def _round_up(x: int, m: int) -> int:
    return -(-x // m) * m


def _choose_tile_rows(rows: int, streams: int, lanes: int, itemsize: int,
                      sub: int, budget: int) -> int:
    """Rows per tile: VMEM-budgeted, capped so splittable slabs split >= 2."""
    per_row = streams * lanes * itemsize
    tr = max(sub, (budget // per_row) // sub * sub)
    tr = min(tr, _MAX_TILE_ROWS)
    if rows > sub:
        # v7x megacore: a "parallel" grid axis only uses both TensorCores when
        # there are >= 2 grid steps, so never collapse a splittable slab into
        # one tile.  No effect on single-TC v5e/v6e.
        tr = min(tr, _round_up((rows + 1) // 2, sub))
    tr = min(tr, _round_up(rows, sub))
    return max(sub, tr)


def _make_fused_prod_kernel(elt_fns, out_dtype):
    """Kernel: o = prod_i elt_i(x) computed on one (tile_rows, lanes) tile."""
    def kernel(x_ref, o_ref):
        x = x_ref[...]
        # res = ones_like(X) makes the leading multiply a no-op; like torch's
        # in-place `res *= elt(X)`, each partial product is cast to X.dtype.
        acc = elt_fns[0](x).astype(out_dtype)
        for fn in elt_fns[1:]:
            acc = (acc * fn(x)).astype(out_dtype)
        o_ref[...] = acc
    return kernel


def _make_slab_prod_kernel(num_elts: int):
    """Fallback kernel: elementwise product of K pre-materialized slabs."""
    def kernel(*refs):
        out_ref = refs[num_elts]
        acc = refs[0][...]
        for i in range(1, num_elts):
            acc = acc * refs[i][...]
        out_ref[...] = acc
    return kernel


def _row_spec(tile_rows: int, lanes: int) -> pl.BlockSpec:
    return pl.BlockSpec((tile_rows, lanes), lambda r: (r, 0))


def _prod_fused(x_slab, elt_fns, out_dtype, tile_rows, lanes, total, itemsize):
    rows = x_slab.shape[0]
    spec = _row_spec(tile_rows, lanes)
    # TODO(synk): input_output_aliases={0: 0} would drop the output HBM
    # allocation, but needs a donation guarantee for the slab buffer; skipped.
    return pl.pallas_call(
        _make_fused_prod_kernel(elt_fns, out_dtype),
        out_shape=jax.ShapeDtypeStruct((rows, lanes), out_dtype),
        grid_spec=pltpu.PrefetchScalarGridSpec(
            num_scalar_prefetch=0,
            grid=(pl.cdiv(rows, tile_rows),),
            in_specs=[spec],
            out_specs=spec),
        compiler_params=pltpu.CompilerParams(
            dimension_semantics=("parallel",),
            vmem_limit_bytes=_vmem_limit()),
        cost_estimate=pl.CostEstimate(
            flops=(2 * len(elt_fns) - 1) * total,
            transcendentals=0,
            bytes_accessed=2 * total * itemsize),
    )(x_slab)


def _prod_slabs(slabs, tile_rows, lanes, total, itemsize):
    num_elts = len(slabs)
    rows = slabs[0].shape[0]
    dtype = slabs[0].dtype
    spec = _row_spec(tile_rows, lanes)
    return pl.pallas_call(
        _make_slab_prod_kernel(num_elts),
        out_shape=jax.ShapeDtypeStruct((rows, lanes), dtype),
        grid_spec=pltpu.PrefetchScalarGridSpec(
            num_scalar_prefetch=0,
            grid=(pl.cdiv(rows, tile_rows),),
            in_specs=[spec] * num_elts,
            out_specs=spec),
        compiler_params=pltpu.CompilerParams(
            dimension_semantics=("parallel",),
            vmem_limit_bytes=_vmem_limit()),
        cost_estimate=pl.CostEstimate(
            flops=(num_elts - 1) * total,
            transcendentals=0,
            bytes_accessed=(num_elts + 1) * total * itemsize),
    )(*slabs)


def math_expr_elt_list_prod_forward(X: jax.Array, elt_fns, fuse: bool = True):
    """Forward pass of MathExprEltList_Prod.

    X:       NCHW (or any-shape) tensor.
    elt_fns: child MathExpr forwards, callables X -> tensor of X's shape.
    fuse:    trace the children inside the kernel (requires pointwise
             children, which MathExpr trees are).  fuse=False materializes
             each elt(X) in HBM and multiplies the K slabs in the kernel.
    """
    if len(elt_fns) == 0:
        return jnp.ones_like(X)              # torch.ones_like(X)

    dtype = X.dtype
    shape = X.shape
    total = int(X.size)

    if len(elt_fns) == 1:
        return elt_fns[0](X).astype(dtype)   # ones * elt(X)

    num_elts = len(elt_fns)
    itemsize = jnp.dtype(dtype).itemsize
    sub = _sublane_multiple(itemsize)
    lanes = _LANES

    rows = _round_up(pl.cdiv(total, lanes), sub)   # <= sub-1 rows of padding
    padded_total = rows * lanes
    budget = (_vmem_limit() * 2) // 3

    def to_slab(y):
        flat = y.reshape(-1)
        if padded_total != total:
            flat = jnp.pad(flat, (0, padded_total - total))
        return flat.reshape(rows, lanes)

    if fuse:
        # Children are applied inside the kernel to the VMEM tile of X, so the
        # tensor crosses HBM exactly twice (read X slab, write the product).
        # TODO(synk): fusion assumes each child is a pointwise map of X (true
        # for MathExpr trees); use fuse=False for children with cross-element
        # ops or shape-changing broadcasting.
        streams = 4 + (num_elts + 2)   # double-buffered in/out + live temps
        tile_rows = _choose_tile_rows(rows, streams, lanes, itemsize, sub,
                                      budget)
        x_slab = to_slab(X)            # pad/flatten X once, before any child
        prod = _prod_fused(x_slab, elt_fns, dtype, tile_rows, lanes, total,
                           itemsize)
    else:
        # Fallback: each elt(X) is materialized in HBM (and padded per child,
        # unavoidable for non-pointwise children), then multiplied tile-wise.
        streams = 2 * (num_elts + 1) + 2
        tile_rows = _choose_tile_rows(rows, streams, lanes, itemsize, sub,
                                      budget)
        slabs = [to_slab(fn(X).astype(dtype)) for fn in elt_fns]
        prod = _prod_slabs(slabs, tile_rows, lanes, total, itemsize)

    if padded_total != total:
        return prod.reshape(-1)[:total].reshape(shape)
    return prod.reshape(shape)


if __name__ == "__main__":
    key = jax.random.PRNGKey(0)
    identity = lambda x: x

    def reference(x, fns):
        res = jnp.ones_like(x)
        for fn in fns:
            res = (res * fn(x)).astype(x.dtype)
        return res

    def check(x, fns, fuse=True):
        out = jax.block_until_ready(
            math_expr_elt_list_prod_forward(x, fns, fuse=fuse))
        ref = reference(x, fns)
        assert out.shape == x.shape and out.dtype == x.dtype
        assert jnp.allclose(out, ref, rtol=1e-6, atol=1e-6)

    X = jax.random.normal(key, (2, 4, 16, 16), dtype=jnp.float32)

    # Fused: three identity children -> X * X * X.
    check(X, [identity, identity, identity])
    # Fused: mixed elementwise children.
    check(X, [identity, lambda x: x + 1.0, lambda x: 2.0 * x])
    # Flattened size not a multiple of 512 (pad + trim path).
    X2 = jax.random.normal(jax.random.PRNGKey(1), (2, 3, 5, 7),
                           dtype=jnp.float32)
    check(X2, [identity, lambda x: x - 0.5])
    # Larger slab: no padding, >= 2 grid steps (megacore / parallel path).
    X3 = jax.random.normal(jax.random.PRNGKey(2), (4, 8, 16, 16),
                           dtype=jnp.float32)
    check(X3, [identity, lambda x: x * x])
    # Ragged final row-tile (rows not a multiple of tile_rows).
    X4 = jax.random.normal(jax.random.PRNGKey(3), (3, 4, 32, 32),
                           dtype=jnp.float32)
    check(X4, [identity, lambda x: x + 1.0])
    # Non-fused fallback (children materialized in HBM).
    check(X, [identity, lambda x: x * x, lambda x: x + 2.0], fuse=False)
    # Empty element list -> ones_like(X) (no kernel needed).
    ones_out = jax.block_until_ready(math_expr_elt_list_prod_forward(X, []))
    assert jnp.allclose(ones_out, jnp.ones_like(X))
    # Single element -> elt(X) directly.
    single = jax.block_until_ready(
        math_expr_elt_list_prod_forward(X, [lambda x: 3.0 * x]))
    assert jnp.allclose(single, 3.0 * X)

    print("KERNEL_OK")
</pallas_src>

<mosaic_0001>
module attributes {stable_mosaic.version = 11 : i64} {
  func.func @kernel(%arg0: i32, %arg1: memref<8x512xf32, #tpu.memory_space<vmem>>, %arg2: memref<8x512xf32, #tpu.memory_space<vmem>>) attributes {dimension_semantics = [#tpu.dimension_semantics<parallel>], iteration_bounds = array<i64: 1>, scalar_prefetch = 0 : i64, scratch_operands = 0 : i64, tpu.core_type = #tpu.core_type<tc>, window_params = [{transform_indices = @transform_0, window_bounds = array<i64: 8, 512>}, {transform_indices = @transform_1, window_bounds = array<i64: 8, 512>}]} {
    %c0 = arith.constant 0 : index
    %c0_0 = arith.constant 0 : index
    %0 = vector.load %arg1[%c0, %c0_0] : memref<8x512xf32, #tpu.memory_space<vmem>>, vector<8x512xf32>
    %1 = arith.mulf %0, %0 : vector<8x512xf32>
    %2 = arith.mulf %1, %0 : vector<8x512xf32>
    %c0_1 = arith.constant 0 : index
    %c0_2 = arith.constant 0 : index
    %3 = vector.load %arg2[%c0_1, %c0_2] : memref<8x512xf32, #tpu.memory_space<vmem>>, vector<8x512xf32>
    tpu.vector_store %arg2[%c0_1, %c0_2], %2 {strides = array<i32>} : memref<8x512xf32, #tpu.memory_space<vmem>>, vector<8x512xf32>,
    return
  }
  func.func @transform_0(%arg0: i32) -> (i32, i32) {
    %c0_i32 = arith.constant 0 : i32
    %c0_i32_0 = arith.constant 0 : i32
    return %arg0, %c0_i32 : i32, i32
  }
  func.func @transform_1(%arg0: i32) -> (i32, i32) {
    %c0_i32 = arith.constant 0 : i32
    %c0_i32_0 = arith.constant 0 : i32
    return %arg0, %c0_i32 : i32, i32
  }
}

</mosaic_0001>

<llo_original>
// kernel: tpu_custom_call.1
$region0: #{tpu_custom_call.1}
  #allocation0 [shape = 'u32[]', space=smem, size = 0x4, offset = 0x4, fixed_abs, tag = 'smem constant byte address 0x4 - core index']
  #allocation1 [shape = 'u32[72,128]{1,0:T(1,128)}', space=vmem, size = 0x9000, scoped, tag = 'internal scratch']
  %s0 = inlined_call_operand.hbm [shape: f32[8,512], index: 0, kind: input, shape index: {}]
  %s1 = inlined_call_operand.hbm [shape: f32[8,512], index: 1, kind: output, shape index: {}]
  %s2 = sld [smem:[#allocation0]]
  $region18: #{tpu_custom_call.1} parent=0
    _
  %s4 = ssub.s32 1, %s2
  %s5 = scalar_select 0, %s4, %s2
  $region1: #{tpu_custom_call.1} parent=0
    #allocation2 [shape = 'u8[16384]{0}', space=vmem, size = 0x4000, scoped, tag = 'input window, operand 0, single buffered']
    #allocation3 [shape = 's32[1]{0}', space=sflag, size = 0x4, scoped, tag = 'scoped memory for tpu_custom_call.1']
    #allocation4 [shape = 's32[1]{0}', space=sflag, size = 0x4, scoped, tag = 'scoped memory for tpu_custom_call.1']
    #allocation5 [shape = 'u8[16384]{0}', space=vmem, size = 0x4000, scoped, tag = 'output window, operand 0, single buffered']
    %6 = vsyncpa [#allocation3], 0
    %7 = vsyncpa [#allocation4], 0
    // Predicated region
    $region2: #{tpu_custom_call.1} parent=1 // pred_check
      _
    $region3: #{tpu_custom_call.1} parent=1 // pred_check_branch
      %9 = sbr.rel (0) target = $region5
    $region4: #{tpu_custom_call.1} parent=1 // pred_region
      %11 = vsyncadd [#allocation3], 0
      %s13 = sshll.u32 %s0, 4
      %s14 = int_to_ptr.hbm [resolvable:$true] %s13
      %s15 = sshll.u32 [#allocation2], 4
      %s16 = int_to_ptr.vmem [resolvable:$true] %s15
      %18 = dma.hbm_to_vmem [thread:$0]  %s14, 512, %s16, [#allocation3]
    $region5: #{tpu_custom_call.1} parent=1 // pred_fallthru
      _
    // Predicated region
    $region6: #{tpu_custom_call.1} parent=1 // pred_check
      _
    $region7: #{tpu_custom_call.1} parent=1 // pred_check_branch
      %20 = sbr.rel (0) target = $region9
    $region8: #{tpu_custom_call.1} parent=1 // pred_region
      %22 = dma.done [#allocation3], 512
    $region9: #{tpu_custom_call.1} parent=1 // pred_fallthru
      _
    %v23 = vld [vmem:[#allocation2] sm:$0xff]
    %v24 = vld [vmem:[#allocation2 + $0x8] sm:$0xff]
    %v25 = vld [vmem:[#allocation2 + $0x10] sm:$0xff]
    %v26 = vld [vmem:[#allocation2 + $0x18] sm:$0xff]
    %v27 = vmul.f32 %v23, %v23
    %v28 = vmul.f32 %v24, %v24
    %v29 = vmul.f32 %v25, %v25
    %v30 = vmul.f32 %v26, %v26
    %v31 = vmul.f32 %v27, %v23
    %v32 = vmul.f32 %v28, %v24
    %v33 = vmul.f32 %v29, %v25
    %v34 = vmul.f32 %v30, %v26
    %35 = vst [vmem:[#allocation5] sm:$0xff] %v31
    %36 = vst [vmem:[#allocation5 + $0x8] sm:$0xff] %v32
    %37 = vst [vmem:[#allocation5 + $0x10] sm:$0xff] %v33
    %38 = vst [vmem:[#allocation5 + $0x18] sm:$0xff] %v34
    // Predicated region
    $region10: #{tpu_custom_call.1} parent=1 // pred_check
      _
    $region11: #{tpu_custom_call.1} parent=1 // pred_check_branch
      %40 = sbr.rel (0) target = $region13
    $region12: #{tpu_custom_call.1} parent=1 // pred_region
      %42 = vsyncadd [#allocation4], 0
      %s44 = sshll.u32 [#allocation5], 4
      %s45 = int_to_ptr.vmem [resolvable:$true] %s44
      %s46 = sshll.u32 %s1, 4
      %s47 = int_to_ptr.hbm [resolvable:$true] %s46
      %49 = dma.vmem_to_hbm [thread:$0]  %s45, 512, %s47, [#allocation4]
    $region13: #{tpu_custom_call.1} parent=1 // pred_fallthru
      _
    // Predicated region
    $region14: #{tpu_custom_call.1} parent=1 // pred_check
      _
    $region15: #{tpu_custom_call.1} parent=1 // pred_check_branch
      %51 = sbr.rel (0) target = $region17
    $region16: #{tpu_custom_call.1} parent=1 // pred_region
      %53 = dma.done [#allocation4], 512
    $region17: #{tpu_custom_call.1} parent=1 // pred_fallthru
      _
    %54 = vsyncpa [#allocation3], 1
    %55 = vsyncpa [#allocation4], 1

</llo_original>
